<compile_context>
chip_gen: v7x
topology: tpu7x:2x2x1
jax: 0.10.0
libtpu: 0.0.40
codegen_flags: <defaults>
</compile_context>

<pallas_src>
import functools

import jax
import jax.numpy as jnp
from jax.experimental import pallas as pl
from jax.experimental.pallas import tpu as pltpu

REDUCTION = 3                 # reduction_size=3 in EquivariantDownSample
WIN = REDUCTION ** 3          # 27 voxels per pooling window


def _round_up(x, m):
    return (x + m - 1) // m * m


def _gather_lane_dense(feats, mask, vpad, r=REDUCTION):
    """(N,D,H,W,C), (N,D,H,W) -> (N, 27, C+1, Vpad), V on the lane axis.

    Single XLA fusion (mask-multiply + concat + reshape + transpose + pad).
    Features are pre-multiplied by the occupancy mask here (mem-bound fusion, the
    multiply is free filler) so the kernel only needs sums; the mask itself is
    appended as channel C so the kernel consumes a single DMA stream.
    """
    n, d, h, w, c = feats.shape
    do, ho, wo = d // r, h // r, w // r
    v = do * ho * wo
    m32 = mask.astype(jnp.float32)[..., None]                       # (N, D, H, W, 1)
    x = jnp.concatenate([feats.astype(jnp.float32) * m32, m32], axis=-1)  # (N,D,H,W,C+1)
    x = x[:, : do * r, : ho * r, : wo * r, :]            # drop partial edge blocks
    x = x.reshape(n, do, r, ho, r, wo, r, c + 1)
    x = x.transpose(0, 2, 4, 6, 7, 1, 3, 5)              # (N, r, r, r, C+1, Do, Ho, Wo)
    x = x.reshape(n, r ** 3, c + 1, v)                   # (N, 27, C+1, V)
    if vpad > v:
        x = jnp.pad(x, ((0, 0), (0, 0), (0, 0), (0, vpad - v)))
    return x


def _window_stats(xb_ref, c):
    """Masked 3x3x3 mean per downsampled voxel, lane-dense.

    xb_ref: (1, 27, C+1, TV) block; channels 0..C-1 are mask-premultiplied features,
    channel C is the occupancy mask.
    Returns feat (C, TV), occ (1, TV).
    """
    xb = xb_ref[0]                         # (27, C+1, TV)
    s = jnp.sum(xb, axis=0)                # (C+1, TV)  -- leading-axis reduce: VPU adds
    fsum = s[0:c, :]                       # (C, TV) masked feature sums
    msum = s[c:c + 1, :]                   # (1, TV) occupied-voxel counts
    occ = (msum > 0.0).astype(jnp.float32)                          # (1, TV)
    inv = pl.reciprocal(jnp.maximum(msum, 1.0), approx=False)       # EUP slot
    feat = fsum * inv                      # fsum is 0 where occ == 0, so feat is 0 there
    return feat, occ


def _pool_partial_kernel(xb_ref, psum_ref, pcnt_ref, *, c):
    """segment=False path: per-tile partial sums for global average pooling."""
    feat, occ = _window_stats(xb_ref, c)
    psum_ref[0, 0] = jnp.sum(feat, axis=1, keepdims=True)   # (C, 1)
    pcnt_ref[0, 0] = jnp.sum(occ, axis=1, keepdims=True)    # (1, 1)


def _downsample_kernel(xb_ref, dsf_ref, dsm_ref, *, c):
    """segment=True path: emit the downsampled sparse tensor (lane-dense)."""
    feat, occ = _window_stats(xb_ref, c)
    dsf_ref[0] = feat                      # (C, TV) -- lane-dense, unmasked stores
    dsm_ref[0] = occ                       # (1, TV)


def equiv_model_forward(feats, mask, segment=False, max_tile_v=2048):
    """feats: (N, D, H, W, C) float; mask: (N, D, H, W) in {0,1}."""
    n, d, h, w, c = feats.shape
    r = REDUCTION
    do, ho, wo = d // r, h // r, w // r
    v = do * ho * wo
    cp = c + 1

    tv = min(max_tile_v, _round_up(v, 128))   # tile of V, multiple of 128
    vpad = _round_up(v, tv)
    nvt = vpad // tv

    xg = _gather_lane_dense(feats, mask, vpad)   # (N, 27, C+1, Vpad)

    cparams = pltpu.CompilerParams(
        dimension_semantics=("parallel", "parallel"),
        vmem_limit_bytes=32 * 1024 * 1024,
    )
    in_spec = pl.BlockSpec((1, WIN, cp, tv), lambda b, vt: (b, 0, 0, vt))

    if segment:
        # forward() with segment=True returns the downsampled (sparse) tensor.
        dsf, dsm = pl.pallas_call(
            functools.partial(_downsample_kernel, c=c),
            out_shape=(
                jax.ShapeDtypeStruct((n, c, vpad), jnp.float32),
                jax.ShapeDtypeStruct((n, 1, vpad), jnp.float32),
            ),
            grid=(n, nvt),
            in_specs=[in_spec],
            out_specs=(
                pl.BlockSpec((1, c, tv), lambda b, vt: (b, 0, vt)),
                pl.BlockSpec((1, 1, tv), lambda b, vt: (b, 0, vt)),
            ),
            compiler_params=cparams,
        )(xg)
        dsf = jnp.transpose(dsf[:, :, :v], (0, 2, 1)).reshape(n, do, ho, wo, c)
        dsm = dsm[:, 0, :v].reshape(n, do, ho, wo)
        return dsf, dsm

    # segment=False (default): downsample + MinkowskiGlobalAvgPooling.
    # The kernel emits only tiny per-tile partial sums/counts; the downsampled
    # tensor is never written back to HBM.
    psum, pcnt = pl.pallas_call(
        functools.partial(_pool_partial_kernel, c=c),
        out_shape=(
            jax.ShapeDtypeStruct((n, nvt, c, 1), jnp.float32),
            jax.ShapeDtypeStruct((n, nvt, 1, 1), jnp.float32),
        ),
        grid=(n, nvt),
        in_specs=[in_spec],
        out_specs=(
            pl.BlockSpec((1, 1, c, 1), lambda b, vt: (b, vt, 0, 0)),
            pl.BlockSpec((1, 1, 1, 1), lambda b, vt: (b, vt, 0, 0)),
        ),
        compiler_params=cparams,
    )(xg)
    fsum_tot = jnp.sum(psum[:, :, :, 0], axis=1)          # (N, C)
    cnt_tot = jnp.sum(pcnt[:, :, 0, 0], axis=1)           # (N,)
    return fsum_tot / jnp.maximum(cnt_tot, 1.0)[:, None]  # (N, C)


# ----------------------------- pure-JAX references -----------------------------

def _block_stats_ref(feats, mask, r=REDUCTION):
    n, d, h, w, c = feats.shape
    do, ho, wo = d // r, h // r, w // r
    x = feats[:, : do * r, : ho * r, : wo * r, :].astype(jnp.float32)
    m = mask[:, : do * r, : ho * r, : wo * r].astype(jnp.float32)[..., None]
    x = x.reshape(n, do, r, ho, r, wo, r, c)
    m = m.reshape(n, do, r, ho, r, wo, r, 1)
    fsum = (x * m).sum(axis=(2, 4, 6))          # (N, Do, Ho, Wo, C)
    msum = m.sum(axis=(2, 4, 6))                # (N, Do, Ho, Wo, 1)
    occ = (msum > 0).astype(jnp.float32)
    feat = (fsum / jnp.maximum(msum, 1.0)) * occ
    return feat, occ[..., 0]


def _reference_downsample(feats, mask):
    return _block_stats_ref(feats, mask)


def _reference_pooled(feats, mask):
    feat, occ = _block_stats_ref(feats, mask)
    n, c = feat.shape[0], feat.shape[-1]
    fs = feat.reshape(n, -1, c).sum(axis=1)
    cn = occ.reshape(n, -1).sum(axis=1)
    return fs / jnp.maximum(cn, 1.0)[:, None]


if __name__ == "__main__":
    key = jax.random.PRNGKey(0)
    kf, km = jax.random.split(key)

    # Primary test: batch=2, 6^3 voxel grid, C=3 channels (irreps_in = '1e').
    N, D, H, W, C = 2, 6, 6, 6, 3
    mask = (jax.random.uniform(km, (N, D, H, W)) < 0.5).astype(jnp.float32)
    feats = jax.random.normal(kf, (N, D, H, W, C), jnp.float32) * mask[..., None]

    out = jax.block_until_ready(equiv_model_forward(feats, mask, segment=False))
    ref = _reference_pooled(feats, mask)
    assert out.shape == (N, C), out.shape
    assert jnp.allclose(out, ref, atol=1e-5, rtol=1e-5), (out, ref)

    dsf, dsm = equiv_model_forward(feats, mask, segment=True)
    dsf, dsm = jax.block_until_ready((dsf, dsm))
    rf, rm = _reference_downsample(feats, mask)
    assert dsf.shape == rf.shape and dsm.shape == rm.shape
    assert jnp.allclose(dsf, rf, atol=1e-5, rtol=1e-5)
    assert jnp.allclose(dsm, rm, atol=1e-5, rtol=1e-5)

    # Multi-V-tile path: exercises grid=(N, nvt>1) with small tiles.
    N2, D2 = 1, 24
    km2, kf2 = jax.random.split(jax.random.PRNGKey(1))
    mask2 = (jax.random.uniform(km2, (N2, D2, D2, D2)) < 0.3).astype(jnp.float32)
    feats2 = jax.random.normal(kf2, (N2, D2, D2, D2, C), jnp.float32) * mask2[..., None]
    out2 = jax.block_until_ready(
        equiv_model_forward(feats2, mask2, segment=False, max_tile_v=128))
    ref2 = _reference_pooled(feats2, mask2)
    assert jnp.allclose(out2, ref2, atol=1e-5, rtol=1e-5), (out2, ref2)

    # Multi-tile segment=True path (lane-dense downsample writeback).
    dsf2, dsm2 = equiv_model_forward(feats2, mask2, segment=True, max_tile_v=128)
    dsf2, dsm2 = jax.block_until_ready((dsf2, dsm2))
    rf2, rm2 = _reference_downsample(feats2, mask2)
    assert jnp.allclose(dsf2, rf2, atol=1e-5, rtol=1e-5)
    assert jnp.allclose(dsm2, rm2, atol=1e-5, rtol=1e-5)

    print("KERNEL_OK")
</pallas_src>

<mosaic_0001>
module attributes {stable_mosaic.version = 11 : i64} {
  func.func @_pool_partial_kernel(%arg0: i32, %arg1: i32, %arg2: memref<1x27x4x128xf32, #tpu.memory_space<vmem>>, %arg3: memref<1x1x3x1xf32, #tpu.memory_space<vmem>>, %arg4: memref<1x1x1x1xf32, #tpu.memory_space<vmem>>) attributes {dimension_semantics = [#tpu.dimension_semantics<parallel>, #tpu.dimension_semantics<parallel>], iteration_bounds = array<i64: 2, 1>, scalar_prefetch = 0 : i64, scratch_operands = 0 : i64, tpu.core_type = #tpu.core_type<tc>, window_params = [{transform_indices = @transform_0, window_bounds = array<i64: 1, 27, 4, 128>}, {transform_indices = @transform_1, window_bounds = array<i64: 1, 1, 3, 1>}, {transform_indices = @transform_2, window_bounds = array<i64: 1, 1, 1, 1>}]} {
    %c0 = arith.constant 0 : index
    %c0_0 = arith.constant 0 : index
    %c0_1 = arith.constant 0 : index
    %c0_2 = arith.constant 0 : index
    %0 = vector.load %arg2[%c0, %c0_0, %c0_1, %c0_2] : memref<1x27x4x128xf32, #tpu.memory_space<vmem>>, vector<1x27x4x128xf32>
    %1 = vector.shape_cast %0 : vector<1x27x4x128xf32> to vector<27x4x128xf32>
    %cst = arith.constant dense<0.000000e+00> : vector<4x128xf32>
    %2 = vector.multi_reduction <add>, %1, %cst [0] : vector<27x4x128xf32> to vector<4x128xf32>
    %3 = vector.extract_strided_slice %2 {offsets = [0, 0], sizes = [3, 128], strides = [1, 1]} : vector<4x128xf32> to vector<3x128xf32>
    %4 = vector.extract_strided_slice %2 {offsets = [3, 0], sizes = [1, 128], strides = [1, 1]} : vector<4x128xf32> to vector<1x128xf32>
    %cst_3 = arith.constant 0.000000e+00 : f32
    %5 = vector.broadcast %cst_3 : f32 to vector<1x128xf32>
    %6 = arith.cmpf ogt, %4, %5 : vector<1x128xf32>
    %7 = arith.extui %6 : vector<1x128xi1> to vector<1x128xi32>
    %8 = arith.sitofp %7 : vector<1x128xi32> to vector<1x128xf32>
    %cst_4 = arith.constant 1.000000e+00 : f32
    %9 = vector.broadcast %cst_4 : f32 to vector<1x128xf32>
    %10 = arith.maximumf %4, %9 : vector<1x128xf32>
    %11 = tpu.reciprocal %10 : vector<1x128xf32> -> vector<1x128xf32>
    %12 = vector.broadcast %11 : vector<1x128xf32> to vector<3x128xf32>
    %13 = arith.mulf %3, %12 : vector<3x128xf32>
    %cst_5 = arith.constant dense<0.000000e+00> : vector<3xf32>
    %14 = vector.multi_reduction <add>, %13, %cst_5 [1] : vector<3x128xf32> to vector<3xf32>
    %15 = vector.shape_cast %14 : vector<3xf32> to vector<3x1xf32>
    %c0_6 = arith.constant 0 : index
    %c0_7 = arith.constant 0 : index
    %c0_8 = arith.constant 0 : index
    %c0_9 = arith.constant 0 : index
    %16 = vector.load %arg3[%c0_6, %c0_7, %c0_8, %c0_9] : memref<1x1x3x1xf32, #tpu.memory_space<vmem>>, vector<1x1x3x1xf32>
    %17 = vector.shape_cast %16 : vector<1x1x3x1xf32> to vector<3x1xf32>
    %18 = vector.shape_cast %15 : vector<3x1xf32> to vector<1x1x3x1xf32>
    tpu.vector_store %arg3[%c0_6, %c0_7, %c0_8, %c0_9], %18 {strides = array<i32>} : memref<1x1x3x1xf32, #tpu.memory_space<vmem>>, vector<1x1x3x1xf32>,
    %cst_10 = arith.constant dense<0.000000e+00> : vector<1xf32>
    %19 = vector.multi_reduction <add>, %8, %cst_10 [1] : vector<1x128xf32> to vector<1xf32>
    %20 = vector.shape_cast %19 : vector<1xf32> to vector<1x1xf32>
    %c0_11 = arith.constant 0 : index
    %c0_12 = arith.constant 0 : index
    %c0_13 = arith.constant 0 : index
    %c0_14 = arith.constant 0 : index
    %21 = vector.load %arg4[%c0_11, %c0_12, %c0_13, %c0_14] : memref<1x1x1x1xf32, #tpu.memory_space<vmem>>, vector<1x1x1x1xf32>
    %22 = vector.shape_cast %21 : vector<1x1x1x1xf32> to vector<1x1xf32>
    %23 = vector.shape_cast %20 : vector<1x1xf32> to vector<1x1x1x1xf32>
    tpu.vector_store %arg4[%c0_11, %c0_12, %c0_13, %c0_14], %23 {strides = array<i32>} : memref<1x1x1x1xf32, #tpu.memory_space<vmem>>, vector<1x1x1x1xf32>,
    return
  }
  func.func @transform_0(%arg0: i32, %arg1: i32) -> (i32, i32, i32, i32) {
    %c0_i32 = arith.constant 0 : i32
    %c0_i32_0 = arith.constant 0 : i32
    %c0_i32_1 = arith.constant 0 : i32
    return %arg0, %c0_i32, %c0_i32_0, %arg1 : i32, i32, i32, i32
  }
  func.func @transform_1(%arg0: i32, %arg1: i32) -> (i32, i32, i32, i32) {
    %c0_i32 = arith.constant 0 : i32
    %c0_i32_0 = arith.constant 0 : i32
    %c0_i32_1 = arith.constant 0 : i32
    return %arg0, %arg1, %c0_i32, %c0_i32_0 : i32, i32, i32, i32
  }
  func.func @transform_2(%arg0: i32, %arg1: i32) -> (i32, i32, i32, i32) {
    %c0_i32 = arith.constant 0 : i32
    %c0_i32_0 = arith.constant 0 : i32
    %c0_i32_1 = arith.constant 0 : i32
    return %arg0, %arg1, %c0_i32, %c0_i32_0 : i32, i32, i32, i32
  }
}

</mosaic_0001>

<llo_original>
// kernel: tpu_custom_call.1
$region0: #{tpu_custom_call.1}
  #allocation0 [shape = 'u32[]', space=smem, size = 0x4, offset = 0x4, fixed_abs, tag = 'smem constant byte address 0x4 - core index']
  #allocation1 [shape = 'u32[144,128]{1,0:T(1,128)}', space=vmem, size = 0x12000, scoped, tag = 'internal scratch']
  %s0 = inlined_call_operand.hbm [shape: f32[2,27,4,128], index: 0, kind: input, shape index: {}]
  %s1 = inlined_call_operand.vmem [shape: f32[2,1,3,1], index: 1, kind: output, shape index: {0}]
  %s2 = inlined_call_operand.vmem [shape: f32[2,1,1,1], index: 2, kind: output, shape index: {1}]
  %3 = xla_tuple %s1, %s2
  %s4 = sld [smem:[#allocation0]]
  $region49: #{tpu_custom_call.1} parent=0
    _
  %s6 = ssub.s32 1, %s4
  %s7 = scalar_select 0, %s6, %s4
  $region1: #{tpu_custom_call.1} parent=0
    #allocation2 [shape = 'u8[110592]{0}', space=vmem, size = 0x1b000, scoped, tag = 'input window, operand 0']
    #allocation3 [shape = 's32[2]{0}', space=sflag, size = 0x8, scoped, tag = 'scoped memory for tpu_custom_call.1']
    %8 = vsyncpa [#allocation3], 0
    %s9 = scalar_lea.sflag [#allocation3], 1
    %10 = vsyncpa %s9, 0
    loop: start=0, step=1, limit=4
    $region2: #{tpu_custom_call.1} parent=1 // loop_pre_header
      _
    $region3: #{tpu_custom_call.1} parent=1 // loop_header
      %s12 = sphi 0, %s16
      %p13 = scmp.ge.s32.totalorder %s12, 4
      %s19 = sphi 0, %s31
      %s20 = sphi 0, %s27
      %s21 = sphi 0, %s19
      %s22 = sphi 0, %s20
      %s23 = sphi 0, %s21
      %s24 = sphi 0, %s22
      %s36 = sphi 0, %s38
      %s39 = sphi 0, %s36
      %s40 = sphi 0, %s39
      %s56 = sphi 0, %s40
      %s64 = sphi 0, %s66
      %s67 = sphi 0, %s64
      %s68 = sphi 0, %s67
      %s84 = sphi 0, %s68
      %s92 = sphi 0, %s94
      %s95 = sphi 0, %s92
      %s96 = sphi 0, %s95
      %s112 = sphi 0, %s96
    $region4: #{tpu_custom_call.1} parent=1 // loop_header_branch
      %15 = sbr.rel (%p13) target = $region8
    $region5: #{tpu_custom_call.1} parent=1 // loop_body
      %s17 = ssub.s32 %s12, 1
      %s18 = ssub.s32 %s12, 2
      %s25 = sadd.s32 1, %s20
      %p26 = scmp.ge.s32.totalorder %s25, 1
      %s27 = scalar_select %p26, 0, %s25
      %s28 = sadd.s32 1, %s19
      %s29 = scalar_select %p26, %s28, %s19
      %p30 = scmp.ge.s32.totalorder %s29, 2
      %s31 = scalar_select %p30, 0, %s29
      %s32 = ssub.s32 %s19, %s31
      %s33 = ssub.s32 %s20, %s27
      %s34 = sor.u32 %s32, %s33
      %p35 = scmp.eq.s32.totalorder %s34, 0
      %s37 = sadd.s32 %s36, 1
      %s38 = scalar_select %p35, %s36, %s37
      %p41 = pneg %p35
      %p42 = scmp.eq.s32.totalorder %s12, 1
      %p43 = por %p41, %p42
      %p44 = scmp.ne.s32.totalorder %s36, %s39
      %p45 = scmp.eq.s32.totalorder %s12, 0
      %p46 = por %p44, %p45
      %p47 = scmp.ne.s32.totalorder %s36, %s39
      %p48 = scmp.eq.s32.totalorder %s17, 1
      %p49 = por %p47, %p48
      %p50 = scmp.ne.s32.totalorder %s39, %s40
      %p51 = scmp.eq.s32.totalorder %s17, 0
      %p52 = por %p50, %p51
      %p53 = scmp.ne.s32.totalorder %s39, %s40
      %p54 = scmp.eq.s32.totalorder %s18, 1
      %p55 = por %p53, %p54
      %p57 = scmp.ne.s32.totalorder %s40, %s56
      %p58 = scmp.eq.s32.totalorder %s18, 0
      %p59 = por %p57, %p58
      %s60 = ssub.s32 %s19, %s31
      %s61 = ssub.s32 %s20, %s27
      %s62 = sor.u32 %s60, %s61
      %p63 = scmp.eq.s32.totalorder %s62, 0
      %s65 = sadd.s32 %s64, 1
      %s66 = scalar_select %p63, %s64, %s65
      %p69 = pneg %p63
      %p70 = scmp.eq.s32.totalorder %s12, 1
      %p71 = por %p69, %p70
      %p72 = scmp.ne.s32.totalorder %s64, %s67
      %p73 = scmp.eq.s32.totalorder %s12, 0
      %p74 = por %p72, %p73
      %p75 = scmp.ne.s32.totalorder %s64, %s67
      %p76 = scmp.eq.s32.totalorder %s17, 1
      %p77 = por %p75, %p76
      %p78 = scmp.ne.s32.totalorder %s67, %s68
      %p79 = scmp.eq.s32.totalorder %s17, 0
      %p80 = por %p78, %p79
      %p81 = scmp.ne.s32.totalorder %s67, %s68
      %p82 = scmp.eq.s32.totalorder %s18, 1
      %p83 = por %p81, %p82
      %p85 = scmp.ne.s32.totalorder %s68, %s84
      %p86 = scmp.eq.s32.totalorder %s18, 0
      %p87 = por %p85, %p86
      %s88 = ssub.s32 %s19, %s31
      %s89 = ssub.s32 %s20, %s27
      %s90 = sor.u32 %s88, %s89
      %p91 = scmp.eq.s32.totalorder %s90, 0
      %s93 = sadd.s32 %s92, 1
      %s94 = scalar_select %p91, %s92, %s93
      %p97 = pneg %p91
      %p98 = scmp.eq.s32.totalorder %s12, 1
      %p99 = por %p97, %p98
      %p100 = scmp.ne.s32.totalorder %s92, %s95
      %p101 = scmp.eq.s32.totalorder %s12, 0
      %p102 = por %p100, %p101
      %p103 = scmp.ne.s32.totalorder %s92, %s95
      %p104 = scmp.eq.s32.totalorder %s17, 1
      %p105 = por %p103, %p104
      %p106 = scmp.ne.s32.totalorder %s95, %s96
      %p107 = scmp.eq.s32.totalorder %s17, 0
      %p108 = por %p106, %p107
      %p109 = scmp.ne.s32.totalorder %s95, %s96
      %p110 = scmp.eq.s32.totalorder %s18, 1
      %p111 = por %p109, %p110
      %p113 = scmp.ne.s32.totalorder %s96, %s112
      %p114 = scmp.eq.s32.totalorder %s18, 0
      %p115 = por %p113, %p114
      %p116 = scmp.le.s32.totalorder 1, %s12
      %p117 = scmp.lt.s32.totalorder %s12, 3
      %p118 = pnand %p116, %p117
      %p119 = pneg %p118
      // Predicated region
      $region9: #{tpu_custom_call.1} parent=5 // pred_check
        _
      $region10: #{tpu_custom_call.1} parent=5 // pred_check_branch
        %121 = sbr.rel (%p118) target = $region12
      $region11: #{tpu_custom_call.1} parent=5 // pred_region
        %s122 = ssub.s32 %s12, 1
      $region12: #{tpu_custom_call.1} parent=5 // pred_fallthru
        _
      %p123 = scmp.lt.s32.totalorder %s12, 2
      // Predicated region
      $region13: #{tpu_custom_call.1} parent=5 // pred_check
        %p124 = pneg %p123
      $region14: #{tpu_custom_call.1} parent=5 // pred_check_branch
        %126 = sbr.rel (%p124) target = $region16
      $region15: #{tpu_custom_call.1} parent=5 // pred_region
        // Predicated region
        $region17: #{tpu_custom_call.1} parent=15 // pred_check
          %p127 = pneg %p46
        $region18: #{tpu_custom_call.1} parent=15 // pred_check_branch
          %129 = sbr.rel (%p127) target = $region20
        $region19: #{tpu_custom_call.1} parent=15 // pred_region
          %s130 = sand.u32 %s36, 1
          %s131 = scalar_lea.sflag [#allocation3], %s130
          %s132 = sand.u32 %s36, 1
          %s133 = smul.addr %s132, 108
          %s134 = scalar_lea.vmem [#allocation2], %s133
          %s136 = ssub.s32 1728, 1728
          %137 = vsyncadd %s131, %s136
          %s138 = smul.addr %s19, 27
          %s139 = sadd.s32 %s20, %s138
          %s140 = smul.addr %s139, 64
          %s141 = scalar_lea.hbm %s0, %s140
          %s142 = sshll.u32 %s134, 4
          %s143 = int_to_ptr.vmem [resolvable:$true] %s142
          %148 = dma.hbm_to_vmem [thread:$0]  %s141, 1728, %s143, %s131, 64, 64, 4
        $region20: #{tpu_custom_call.1} parent=15 // pred_fallthru
          _
      $region16: #{tpu_custom_call.1} parent=5 // pred_fallthru
        _
      %p149 = scmp.le.s32.totalorder 1, %s12
      %p150 = scmp.lt.s32.totalorder %s12, 3
      %p151 = pnand %p149, %p150
      %p152 = pneg %p151
      // Predicated region
      $region21: #{tpu_custom_call.1} parent=5 // pred_check
        _
      $region22: #{tpu_custom_call.1} parent=5 // pred_check_branch
        %154 = sbr.rel (%p151) target = $region24
      $region23: #{tpu_custom_call.1} parent=5 // pred_region
        %s155 = ssub.s32 %s12, 1
        %s156 = sand.u32 %s39, 1
        %s157 = scalar_lea.sflag [#allocation3], %s156
        %s158 = sand.u32 %s39, 1
        %s159 = smul.addr %s158, 108
        %s160 = scalar_lea.vmem [#allocation2], %s159
        // Predicated region
        $region25: #{tpu_custom_call.1} parent=23 // pred_check
          %p161 = pneg %p52
        $region26: #{tpu_custom_call.1} parent=23 // pred_check_branch
          %163 = sbr.rel (%p161) target = $region28
        $region27: #{tpu_custom_call.1} parent=23 // pred_region
          %164 = dma.done %s157, 1728
        $region28: #{tpu_custom_call.1} parent=23 // pred_fallthru
          _
        %s165 = sand.u32 %s39, 1
        %s166 = scalar_lea.sflag [#allocation3], %s165
        %s167 = sand.u32 %s39, 1
        %s168 = smul.addr %s167, 108
        %s169 = scalar_lea.vmem [#allocation2], %s168
        %p170 = pneg %p52
        %p171 = pneg %p49
        %p172 = pneg %p80
        %p173 = pneg %p77
        %p174 = scmp.lt.s32.totalorder %s21, 1
        %s175 = scalar_select %p174, %s21, 1
        %p176 = scmp.lt.s32.totalorder %s22, 0
        %s177 = scalar_select %p176, %s22, 0
        %s178 = sadd.s32 %s177, %s175
        %s179 = smul.addr %s178, 4
        %s180 = scalar_lea.vmem %s1, %s179
        %p181 = pneg %p108
        %p182 = pneg %p105
        %p183 = scmp.lt.s32.totalorder %s21, 1
        %s184 = scalar_select %p183, %s21, 1
        %p185 = scmp.lt.s32.totalorder %s22, 0
        %s186 = scalar_select %p185, %s22, 0
        %s187 = sadd.s32 %s186, %s184
        %s188 = scalar_lea.vmem %s2, %s187
        %p189 = scmp.lt.s32.totalorder %s21, 1
        %s190 = scalar_select %p189, %s21, 1
        %p191 = scmp.lt.s32.totalorder %s22, 0
        %s192 = scalar_select %p191, %s22, 0
        %s193 = sadd.s32 %s192, %s190
        %s194 = smul.addr %s193, 4
        %s195 = scalar_lea.vmem %s1, %s194
        %p196 = scmp.lt.s32.totalorder %s21, 1
        %s197 = scalar_select %p196, %s21, 1
        %p198 = scmp.lt.s32.totalorder %s22, 0
        %s199 = scalar_select %p198, %s22, 0
        %s200 = sadd.s32 %s199, %s197
        %s201 = scalar_lea.vmem %s2, %s200
        %v202 = vld [vmem:[%s160] sm:$0xf]
        %v203 = vld [vmem:[%s160 + $0x4] sm:$0xf]
        %v204 = vld [vmem:[%s160 + $0x8] sm:$0xf]
        %v205 = vld [vmem:[%s160 + $0xc] sm:$0xf]
        %v206 = vld [vmem:[%s160 + $0x10] sm:$0xf]
        %v207 = vld [vmem:[%s160 + $0x14] sm:$0xf]
        %v208 = vld [vmem:[%s160 + $0x18] sm:$0xf]
        %v209 = vld [vmem:[%s160 + $0x1c] sm:$0xf]
        %v210 = vld [vmem:[%s160 + $0x20] sm:$0xf]
        %v211 = vld [vmem:[%s160 + $0x24] sm:$0xf]
        %v212 = vld [vmem:[%s160 + $0x28] sm:$0xf]
        %v213 = vld [vmem:[%s160 + $0x2c] sm:$0xf]
        %v214 = vld [vmem:[%s160 + $0x30] sm:$0xf]
        %v215 = vld [vmem:[%s160 + $0x34] sm:$0xf]
        %v216 = vld [vmem:[%s160 + $0x38] sm:$0xf]
        %v217 = vld [vmem:[%s160 + $0x3c] sm:$0xf]
        %v218 = vld [vmem:[%s160 + $0x40] sm:$0xf]
        %v219 = vld [vmem:[%s160 + $0x44] sm:$0xf]
        %v220 = vld [vmem:[%s160 + $0x48] sm:$0xf]
        %v221 = vld [vmem:[%s160 + $0x4c] sm:$0xf]
        %v222 = vld [vmem:[%s160 + $0x50] sm:$0xf]
        %v223 = vld [vmem:[%s160 + $0x54] sm:$0xf]
        %v224 = vld [vmem:[%s160 + $0x58] sm:$0xf]
        %v225 = vld [vmem:[%s160 + $0x5c] sm:$0xf]
        %v226 = vld [vmem:[%s160 + $0x60] sm:$0xf]
        %v227 = vld [vmem:[%s160 + $0x64] sm:$0xf]
        %v228 = vld [vmem:[%s160 + $0x68] sm:$0xf]
        %vm229 = vcmask 1043456
        %v230 = vsel %vm229, %v202, 0.0
        %v231 = vsel %vm229, %v203, 0.0
        %v232 = vadd.f32 %v230, %v231
        %v233 = vsel %vm229, %v204, 0.0
        %v234 = vadd.f32 %v232, %v233
        %v235 = vsel %vm229, %v205, 0.0
        %v236 = vadd.f32 %v234, %v235
        %v237 = vsel %vm229, %v206, 0.0
        %v238 = vadd.f32 %v236, %v237
        %v239 = vsel %vm229, %v207, 0.0
        %v240 = vadd.f32 %v238, %v239
        %v241 = vsel %vm229, %v208, 0.0
        %v242 = vadd.f32 %v240, %v241
        %v243 = vsel %vm229, %v209, 0.0
        %v244 = vadd.f32 %v242, %v243
        %v245 = vsel %vm229, %v210, 0.0
        %v246 = vadd.f32 %v244, %v245
        %v247 = vsel %vm229, %v211, 0.0
        %v248 = vadd.f32 %v246, %v247
        %v249 = vsel %vm229, %v212, 0.0
        %v250 = vadd.f32 %v248, %v249
        %v251 = vsel %vm229, %v213, 0.0
        %v252 = vadd.f32 %v250, %v251
        %v253 = vsel %vm229, %v214, 0.0
        %v254 = vadd.f32 %v252, %v253
        %v255 = vsel %vm229, %v215, 0.0
        %v256 = vadd.f32 %v254, %v255
        %v257 = vsel %vm229, %v216, 0.0
        %v258 = vadd.f32 %v256, %v257
        %v259 = vsel %vm229, %v217, 0.0
        %v260 = vadd.f32 %v258, %v259
        %v261 = vsel %vm229, %v218, 0.0
        %v262 = vadd.f32 %v260, %v261
        %v263 = vsel %vm229, %v219, 0.0
        %v264 = vadd.f32 %v262, %v263
        %v265 = vsel %vm229, %v220, 0.0
        %v266 = vadd.f32 %v264, %v265
        %v267 = vsel %vm229, %v221, 0.0
        %v268 = vadd.f32 %v266, %v267
        %v269 = vsel %vm229, %v222, 0.0
        %v270 = vadd.f32 %v268, %v269
        %v271 = vsel %vm229, %v223, 0.0
        %v272 = vadd.f32 %v270, %v271
        %v273 = vsel %vm229, %v224, 0.0
        %v274 = vadd.f32 %v272, %v273
        %v275 = vsel %vm229, %v225, 0.0
        %v276 = vadd.f32 %v274, %v275
        %v277 = vsel %vm229, %v226, 0.0
        %v278 = vadd.f32 %v276, %v277
        %v279 = vsel %vm229, %v227, 0.0
        %v280 = vadd.f32 %v278, %v279
        %v281 = vsel %vm229, %v228, 0.0
        %v282 = vadd.f32 %v280, %v281
        %vm283 = vcmp.gt.f32.partialorder %v282, 0.0
        %v284 = vsel %vm283, 1, 0
        %v285 = vcvt.s32.f32 %v284
        %v286 = vmax.f32 %v282, 1.0
        %v287 = vrcp.pop %v286
        %v288 = vlaneseq
        %v289 = vshrl.u32 %v288, 7
        %v290 = vsub.s32 3, %v289
        %v291 = vrot.slane %v287, %v290
        %v292 = vmul.f32 %v282, %v291
        %vm293 = vcmask 1042432
        %v294 = vsel %vm293, %v292, 0.0
        %295 = vadd.xlane.f32.xlu0 %v294
        %v296 = vpop.xlane.xlu0 %295
        %vm297 = vcmask 2048
        %298 = vst.msk [vmem:[%s195] sm:$0x7] %vm297, %v296
        %vm299 = vcmask 1043459
        %v300 = vsel %vm299, %v285, 0.0
        %301 = vadd.xlane.f32.xlu0 %v300
        %v302 = vpop.xlane.xlu0 %301
        %vm303 = vcmask 3075
        %304 = vst.msk [vmem:[%s201 - $0x3] sm:$0x8] %vm303, %v302
        %p305 = scmp.lt.s32.totalorder %s21, 1
        %s306 = scalar_select %p305, %s21, 1
        %p307 = scmp.lt.s32.totalorder %s22, 0
        %s308 = scalar_select %p307, %s22, 0
        %s309 = sadd.s32 %s308, %s306
        %s310 = smul.addr %s309, 4
        %s311 = scalar_lea.vmem %s1, %s310
        %p312 = scmp.lt.s32.totalorder %s21, 1
        %s313 = scalar_select %p312, %s21, 1
        %p314 = scmp.lt.s32.totalorder %s22, 0
        %s315 = scalar_select %p314, %s22, 0
        %s316 = sadd.s32 %s315, %s313
        %s317 = scalar_lea.vmem %s2, %s316
        // Predicated region
        $region29: #{tpu_custom_call.1} parent=23 // pred_check
          %p318 = pneg %p77
        $region30: #{tpu_custom_call.1} parent=23 // pred_check_branch
          %320 = sbr.rel (%p318) target = $region32
        $region31: #{tpu_custom_call.1} parent=23 // pred_region
          _
        $region32: #{tpu_custom_call.1} parent=23 // pred_fallthru
          _
        // Predicated region
        $region33: #{tpu_custom_call.1} parent=23 // pred_check
          %p321 = pneg %p105
        $region34: #{tpu_custom_call.1} parent=23 // pred_check_branch
          %323 = sbr.rel (%p321) target = $region36
        $region35: #{tpu_custom_call.1} parent=23 // pred_region
          _
        $region36: #{tpu_custom_call.1} parent=23 // pred_fallthru
          _
      $region24: #{tpu_custom_call.1} parent=5 // pred_fallthru
        _
      %p324 = scmp.le.s32.totalorder 2, %s12
      // Predicated region
      $region37: #{tpu_custom_call.1} parent=5 // pred_check
        %p325 = pneg %p324
      $region38: #{tpu_custom_call.1} parent=5 // pred_check_branch
        %327 = sbr.rel (%p325) target = $region40
      $region39: #{tpu_custom_call.1} parent=5 // pred_region
        %s328 = ssub.s32 %s12, 2
        // Predicated region
        $region41: #{tpu_custom_call.1} parent=39 // pred_check
          %p329 = pneg %p83
        $region42: #{tpu_custom_call.1} parent=39 // pred_check_branch
          %331 = sbr.rel (%p329) target = $region44
        $region43: #{tpu_custom_call.1} parent=39 // pred_region
          %p332 = scmp.lt.s32.totalorder %s23, 1
          %s333 = scalar_select %p332, %s23, 1
          %p334 = scmp.lt.s32.totalorder %s24, 0
          %s335 = scalar_select %p334, %s24, 0
          %s336 = sadd.s32 %s335, %s333
          %s337 = smul.addr %s336, 4
          %s338 = scalar_lea.vmem %s1, %s337
        $region44: #{tpu_custom_call.1} parent=39 // pred_fallthru
          _
        // Predicated region
        $region45: #{tpu_custom_call.1} parent=39 // pred_check
          %p339 = pneg %p111
        $region46: #{tpu_custom_call.1} parent=39 // pred_check_branch
          %341 = sbr.rel (%p339) target = $region48
        $region47: #{tpu_custom_call.1} parent=39 // pred_region
          %p342 = scmp.lt.s32.totalorder %s23, 1
          %s343 = scalar_select %p342, %s23, 1
          %p344 = scmp.lt.s32.totalorder %s24, 0
          %s345 = scalar_select %p344, %s24, 0
          %s346 = sadd.s32 %s345, %s343
          %s347 = scalar_lea.vmem %s2, %s346
        $region48: #{tpu_custom_call.1} parent=39 // pred_fallthru
          _
      $region40: #{tpu_custom_call.1} parent=5 // pred_fallthru
        _
    $region6: #{tpu_custom_call.1} parent=1 // loop_footer
      %s16 = sadd.s32 1, %s12
    $region7: #{tpu_custom_call.1} parent=1 // loop_footer_branch
      %11 = sbr.rel target = $region3
    $region8: #{tpu_custom_call.1} parent=1 // loop_exit
      _
    %348 = vsyncpa [#allocation3], 1
    %s349 = scalar_lea.sflag [#allocation3], 1
    %350 = vsyncpa %s349, 1

</llo_original>
